<compile_context>
chip_gen: v6e
topology: v6e:2x2x1
jax: 0.10.0
libtpu: 0.0.40
codegen_flags: <defaults>
</compile_context>

<pallas_src>
import jax
import jax.numpy as jnp
from jax.experimental import pallas as pl
from jax.experimental.pallas import tpu as pltpu


# ----------------------------------------------------------------------------- constants / helpers

_X_TILE_MAX = 4 << 20        # max bytes for one (double-buffered) x tile; sweep shows ~85%+ of
                             # HBM roofline at 512-1024-wide tiles, bigger buys nothing
_VMEM_BUDGET = 28 << 20      # conservative total working set: fits every generation incl. v7x
_VMEM_LIMIT_CAP = 48 << 20   # never request more scoped VMEM than this (v7x has 64 MiB physical)
_W_RESIDENT_MAX = 8 << 20    # keep the folded weight fully VMEM-resident if (2x buffered) <= this


def _ru(a, m):
    return (a + m - 1) // m * m


def _tile_candidates_batch(B):
    # TB must be a multiple of 8 (out block second-to-last dim) or equal B.
    cands = [d for d in range(8, B + 1, 8) if B % d == 0]
    if B not in cands:
        cands.append(B)
    # Prefer tiles that give >= 2 batch grid steps (v7x megacore split), larger first.
    multi = sorted((t for t in cands if B // t >= 2), reverse=True)
    rest = sorted((t for t in cands if B // t < 2), reverse=True)
    return multi + rest


def _tile_candidates_chan(C):
    # TC must be a multiple of 8 (x block second-to-last dim) or equal C (full-dim block).
    cands = [d for d in range(8, C + 1, 8) if C % d == 0]
    if C not in cands:
        cands.append(C)
    return sorted(cands, reverse=True)


def _pick_tiles(B, C, S, n_pad, x_elem_bytes):
    """Budget-aware tile selection. Returns (tb, tc, resident_w, vmem_estimate_bytes)."""
    tb_list = _tile_candidates_batch(B)
    tc_list = _tile_candidates_chan(C)

    w_full = 2 * _ru(C, 8) * n_pad * 4          # resident folded weight, double-buffer-counted
    bias_b = 2 * 8 * n_pad * 4

    def plan(tb, tc):
        resident_w = (w_full <= _W_RESIDENT_MAX) or (tc == C)
        # Padded VMEM footprint of one x tile (lane dim rounds to 128, sublanes to 8).
        x_tile = tb * _ru(tc, 8) * _ru(S, 128) * x_elem_bytes
        w_b = w_full if resident_w else 2 * _ru(tc, 8) * n_pad * 4
        out_b = 2 * _ru(tb, 8) * n_pad * 4
        total = 2 * x_tile + w_b + out_b + bias_b
        return resident_w, x_tile, total

    for tb in tb_list:
        for tc in tc_list:                       # largest channel tile that fits
            resident_w, x_tile, total = plan(tb, tc)
            if x_tile <= _X_TILE_MAX and total <= _VMEM_BUDGET:
                return tb, tc, resident_w, total

    # Pathological shapes: smallest-footprint tiling (may exceed the soft budget).
    tb, tc = min(tb_list), min(tc_list)
    resident_w, _, total = plan(tb, tc)
    return tb, tc, resident_w, total


# ----------------------------------------------------------------------------- kernel

def _make_kernel(*, gem_eps, static_p, dynamic, multi_c, resident_w, tc):
    """Build the kernel body for the chosen configuration."""

    def gem_pool(x_raw, p_scalar, inv_p_scalar):
        # x_raw: (TB, TC, S) in the input dtype; upcast in-kernel (halves HBM traffic for bf16).
        x = jnp.maximum(x_raw.astype(jnp.float32), gem_eps)      # clamp(min=eps) -> x > 0
        if static_p is not None:
            ip = int(round(static_p))
            if abs(static_p - ip) < 1e-12 and 1 <= ip <= 8:
                # Integer exponent -> repeated VPU multiplies; keeps the single EUP slot free.
                xp = x
                for _ in range(ip - 1):
                    xp = xp * x
            else:
                xp = jnp.exp(jnp.float32(static_p) * jnp.log(x))
            pooled = jnp.mean(xp, axis=-1)                       # (TB, TC): XLU reduce over S
            gem = jnp.exp(jnp.float32(1.0 / static_p) * jnp.log(pooled))   # tiny: TB*TC elems
        else:
            # Runtime (learnable) p from SMEM: x**p = exp(p*log(x)), x > 0 guaranteed by clamp.
            xp = jnp.exp(p_scalar * jnp.log(x))
            pooled = jnp.mean(xp, axis=-1)
            gem = jnp.exp(inv_p_scalar * jnp.log(pooled))
        return gem

    def body(x_ref, w_ref, bias_ref, out_ref, p_scalar, inv_p_scalar):
        gem = gem_pool(x_ref[...], p_scalar, inv_p_scalar)       # (TB, TC), C on lanes

        if not multi_c:
            # Single channel tile: no accumulation machinery at all.
            out_ref[...] = (jnp.dot(gem, w_ref[...], preferred_element_type=jnp.float32)
                            + bias_ref[...])
            return

        ci = pl.program_id(1)
        if resident_w:
            # Full weight is VMEM-resident (fetched once); slice this channel tile.
            w = w_ref[pl.ds(pl.multiple_of(ci * tc, tc), tc), :]
        else:
            w = w_ref[...]
        part = jnp.dot(gem, w, preferred_element_type=jnp.float32)

        # Accumulate directly into the (VMEM-resident) f32 output block.
        @pl.when(ci == 0)
        def _init():
            out_ref[...] = part + bias_ref[...]

        @pl.when(ci > 0)
        def _acc():
            out_ref[...] = out_ref[...] + part

    if dynamic:
        def kernel(p_ref, x_ref, w_ref, bias_ref, out_ref):
            body(x_ref, w_ref, bias_ref, out_ref, p_ref[0], p_ref[1])
        return kernel

    def kernel(x_ref, w_ref, bias_ref, out_ref):
        body(x_ref, w_ref, bias_ref, out_ref, None, None)
    return kernel


# ----------------------------------------------------------------------------- wrapper

def auxiliary_classifier_head(feat, p, gamma, beta, running_mean, running_var,
                              cls_weight, *, gem_eps=1e-6, bn_eps=1e-5):
    """feat: (B, C, H, W); cls_weight: (num_classes, C) (PyTorch layout). Returns (B, num_classes) f32."""
    B, C, H, W = feat.shape
    S = H * W
    N = cls_weight.shape[0]

    # Native layout for the kernel: (B, C, S) is a pure reshape of contiguous NCHW (no transpose,
    # no extra HBM pass). Spatial S lands on lanes, channels on sublanes; the pooled tile comes
    # out with C on lanes, exactly what the MXU contraction wants.
    x = feat.reshape(B, C, S)

    # Fold BatchNorm1d (inference mode, running statistics) into the classifier weight/bias.
    scale = gamma.astype(jnp.float32) * jax.lax.rsqrt(
        running_var.astype(jnp.float32) + jnp.float32(bn_eps))              # (C,)
    shift = beta.astype(jnp.float32) - running_mean.astype(jnp.float32) * scale
    w_t = cls_weight.astype(jnp.float32).T                                   # (C, N)
    w_fold = scale[:, None] * w_t                                            # (C, N)
    bias_row = shift @ w_t                                                   # (N,)

    # Lane-dense output: pad the class dim to a multiple of 128 (unmasked stores, aligned MXU tile).
    n_pad = _ru(N, 128)
    if n_pad != N:
        w_fold = jnp.pad(w_fold, ((0, 0), (0, n_pad - N)))
        bias_row = jnp.pad(bias_row, (0, n_pad - N))
    bias_row = bias_row.reshape(1, n_pad)

    x_elem_bytes = jnp.dtype(feat.dtype).itemsize
    tb, tc, resident_w, vmem_est = _pick_tiles(B, C, S, n_pad, x_elem_bytes)
    kb, kc = B // tb, C // tc
    grid = (kb, kc)                      # batch parallel (megacore), channel reduction last
    multi_c = kc > 1

    x_spec = pl.BlockSpec((tb, tc, S), lambda bi, ci: (bi, ci, 0))
    if resident_w:
        w_spec = pl.BlockSpec((C, n_pad), lambda bi, ci: (0, 0))     # fetched once, stays in VMEM
    else:
        w_spec = pl.BlockSpec((tc, n_pad), lambda bi, ci: (ci, 0))
    b_spec = pl.BlockSpec((1, n_pad), lambda bi, ci: (0, 0))
    out_spec = pl.BlockSpec((tb, n_pad), lambda bi, ci: (bi, 0))     # resident across the C axis

    # Explicit scoped-VMEM limit: ~2x the estimated working set, floored above default limits and
    # capped so we always leave headroom under v7x's 64 MiB physical VMEM.
    vmem_limit = int(min(_VMEM_LIMIT_CAP, max(2 * vmem_est, 32 << 20)))
    cparams = pltpu.CompilerParams(
        dimension_semantics=("parallel", "arbitrary"),
        vmem_limit_bytes=vmem_limit)
    # NOTE: if profiling shows exposed DMA at this tile size, x_spec can take
    # pipeline_mode=pl.Buffered(3) (budget the third buffer on v7x first).

    # Specialize the GeM exponent when it is concrete at trace time (usual inference case).
    try:
        static_p = float(p)
    except Exception:                    # traced/learnable p -> SMEM scalar path
        static_p = None

    kernel = _make_kernel(gem_eps=float(gem_eps), static_p=static_p,
                          dynamic=(static_p is None), multi_c=multi_c,
                          resident_w=resident_w, tc=tc)
    out_shape = jax.ShapeDtypeStruct((B, n_pad), jnp.float32)

    if static_p is not None:
        out = pl.pallas_call(
            kernel, out_shape=out_shape, grid=grid,
            in_specs=[x_spec, w_spec, b_spec],
            out_specs=out_spec,
            compiler_params=cparams,
        )(x, w_fold, bias_row)
    else:
        p32 = jnp.asarray(p, jnp.float32)
        p_arr = jnp.stack([p32, 1.0 / p32])                        # [p, 1/p] in SMEM
        out = pl.pallas_call(
            kernel, out_shape=out_shape, grid=grid,
            in_specs=[pl.BlockSpec(memory_space=pltpu.MemorySpace.SMEM),
                      x_spec, w_spec, b_spec],
            out_specs=out_spec,
            compiler_params=cparams,
        )(p_arr, x, w_fold, bias_row)

    return out if n_pad == N else out[:, :N]


# ----------------------------------------------------------------------------- reference

def _reference(feat, p, gamma, beta, running_mean, running_var, cls_weight,
               gem_eps=1e-6, bn_eps=1e-5):
    B, C, H, W = feat.shape
    x = jnp.maximum(feat.astype(jnp.float32), gem_eps) ** p
    pooled = jnp.mean(x.reshape(B, C, H * W), axis=-1) ** (1.0 / p)
    bn = (pooled - running_mean) * jax.lax.rsqrt(running_var + bn_eps) * gamma + beta
    return bn @ cls_weight.T


if __name__ == "__main__":
    # Small, deterministic example shapes implied by the module's forward pass.
    B, C, H, W = 2, 32, 16, 16          # feat_dim = C = 32
    NUM_CLASSES = 16

    key = jax.random.PRNGKey(0)
    k_feat, k_gamma, k_mean, k_var, k_w = jax.random.split(key, 5)

    feat = jax.random.normal(k_feat, (B, C, H, W), jnp.float32)

    # GeneralizedMeanPoolingP: learnable p, initialized to 3.0
    p = jnp.float32(3.0)

    # BatchNorm1d params (weights_init_kaiming -> gamma ~ 1, bias frozen at 0).
    gamma = 1.0 + 0.02 * jax.random.normal(k_gamma, (C,), jnp.float32)
    beta = jnp.zeros((C,), jnp.float32)
    running_mean = 0.1 * jax.random.normal(k_mean, (C,), jnp.float32)
    running_var = 0.5 + jax.random.uniform(k_var, (C,), jnp.float32)

    # Linear classifier (weights_init_classifier -> normal std=0.001), bias=False.
    cls_weight = 0.001 * jax.random.normal(k_w, (NUM_CLASSES, C), jnp.float32)

    ref = _reference(feat, p, gamma, beta, running_mean, running_var, cls_weight)

    # Static-p path (p concrete -> VPU-specialized x**3, single-channel-tile fast path).
    out = auxiliary_classifier_head(feat, p, gamma, beta, running_mean,
                                    running_var, cls_weight)
    out = jax.block_until_ready(out)
    assert out.shape == (B, NUM_CLASSES)
    assert jnp.allclose(out, ref, atol=1e-5, rtol=1e-4), "static-p path mismatch vs reference"

    # Runtime-p path (p traced under jit -> SMEM scalar inside the kernel).
    jit_head = jax.jit(auxiliary_classifier_head)
    out_dyn = jax.block_until_ready(
        jit_head(feat, p, gamma, beta, running_mean, running_var, cls_weight))
    assert out_dyn.shape == (B, NUM_CLASSES)
    assert jnp.allclose(out_dyn, ref, atol=1e-5, rtol=1e-4), "runtime-p path mismatch vs reference"

    print("KERNEL_OK")
</pallas_src>

<mosaic_0001>
module attributes {stable_mosaic.version = 11 : i64} {
  func.func @kernel(%arg0: i32, %arg1: i32, %arg2: memref<2x32x256xf32, #tpu.memory_space<vmem>>, %arg3: memref<32x128xf32, #tpu.memory_space<vmem>>, %arg4: memref<1x128xf32, #tpu.memory_space<vmem>>, %arg5: memref<2x128xf32, #tpu.memory_space<vmem>>) attributes {dimension_semantics = [#tpu.dimension_semantics<parallel>, #tpu.dimension_semantics<arbitrary>], iteration_bounds = array<i64: 1, 1>, scalar_prefetch = 0 : i64, scratch_operands = 0 : i64, tpu.core_type = #tpu.core_type<tc>, window_params = [{transform_indices = @transform_0, window_bounds = array<i64: 2, 32, 256>}, {pipeline_mode = #tpu.pipeline_mode<synchronous>, transform_indices = @transform_1, window_bounds = array<i64: 32, 128>}, {pipeline_mode = #tpu.pipeline_mode<synchronous>, transform_indices = @transform_2, window_bounds = array<i64: 1, 128>}, {transform_indices = @transform_3, window_bounds = array<i64: 2, 128>}]} {
    %c0 = arith.constant 0 : index
    %c0_0 = arith.constant 0 : index
    %c0_1 = arith.constant 0 : index
    %0 = vector.load %arg2[%c0, %c0_0, %c0_1] : memref<2x32x256xf32, #tpu.memory_space<vmem>>, vector<2x32x256xf32>
    %cst = arith.constant 9.99999997E-7 : f32
    %1 = vector.broadcast %cst : f32 to vector<2x32x256xf32>
    %2 = arith.maximumf %0, %1 : vector<2x32x256xf32>
    %3 = arith.mulf %2, %2 : vector<2x32x256xf32>
    %4 = arith.mulf %3, %2 : vector<2x32x256xf32>
    %cst_2 = arith.constant dense<0.000000e+00> : vector<2x32xf32>
    %5 = vector.multi_reduction <add>, %4, %cst_2 [2] : vector<2x32x256xf32> to vector<2x32xf32>
    %cst_3 = arith.constant 2.560000e+02 : f32
    %6 = vector.broadcast %cst_3 : f32 to vector<2x32xf32>
    %7 = arith.divf %5, %6 : vector<2x32xf32>
    %8 = math.log %7 : vector<2x32xf32>
    %cst_4 = arith.constant 0.333333343 : f32
    %9 = vector.broadcast %cst_4 : f32 to vector<2x32xf32>
    %10 = arith.mulf %9, %8 : vector<2x32xf32>
    %11 = math.exp %10 : vector<2x32xf32>
    %c0_5 = arith.constant 0 : index
    %c0_6 = arith.constant 0 : index
    %12 = vector.load %arg3[%c0_5, %c0_6] : memref<32x128xf32, #tpu.memory_space<vmem>>, vector<32x128xf32>
    %cst_7 = arith.constant dense<0.000000e+00> : vector<2x128xf32>
    %13 = tpu.matmul %11, %12, %cst_7 {dimension_numbers = #tpu.dot_dimension_numbers<[1], [0], [0], [1], [0, 0, 1, 1], [], []>} : vector<2x32xf32>, vector<32x128xf32>, vector<2x128xf32> -> vector<2x128xf32>
    %c0_8 = arith.constant 0 : index
    %c0_9 = arith.constant 0 : index
    %14 = vector.load %arg4[%c0_8, %c0_9] : memref<1x128xf32, #tpu.memory_space<vmem>>, vector<1x128xf32>
    %15 = vector.broadcast %14 : vector<1x128xf32> to vector<2x128xf32>
    %16 = arith.addf %13, %15 : vector<2x128xf32>
    %c0_10 = arith.constant 0 : index
    %c0_11 = arith.constant 0 : index
    %17 = vector.load %arg5[%c0_10, %c0_11] : memref<2x128xf32, #tpu.memory_space<vmem>>, vector<2x128xf32>
    tpu.vector_store %arg5[%c0_10, %c0_11], %16 {strides = array<i32>} : memref<2x128xf32, #tpu.memory_space<vmem>>, vector<2x128xf32>,
    return
  }
  func.func @transform_0(%arg0: i32, %arg1: i32) -> (i32, i32, i32) {
    %c0_i32 = arith.constant 0 : i32
    %c0_i32_0 = arith.constant 0 : i32
    return %arg0, %arg1, %c0_i32 : i32, i32, i32
  }
  func.func @transform_1(%arg0: i32, %arg1: i32) -> (i32, i32) {
    %c0_i32 = arith.constant 0 : i32
    %c0_i32_0 = arith.constant 0 : i32
    %c0_i32_1 = arith.constant 0 : i32
    return %c0_i32, %c0_i32_0 : i32, i32
  }
  func.func @transform_2(%arg0: i32, %arg1: i32) -> (i32, i32) {
    %c0_i32 = arith.constant 0 : i32
    %c0_i32_0 = arith.constant 0 : i32
    %c0_i32_1 = arith.constant 0 : i32
    return %c0_i32, %c0_i32_0 : i32, i32
  }
  func.func @transform_3(%arg0: i32, %arg1: i32) -> (i32, i32) {
    %c0_i32 = arith.constant 0 : i32
    %c0_i32_0 = arith.constant 0 : i32
    return %arg0, %c0_i32 : i32, i32
  }
}

</mosaic_0001>

<llo_original>
// kernel: tpu_custom_call.1
$region0: #{tpu_custom_call.1}
  #allocation0 [shape = 'u32[]', space=smem, size = 0x4, offset = 0x4, fixed_abs, tag = 'smem constant byte address 0x4 - core index']
  #allocation1 [shape = 'u32[144,128]{1,0:T(1,128)}', space=vmem, size = 0x12000, scoped, tag = 'internal scratch']
  %s0 = inlined_call_operand.hbm [shape: f32[2,32,256], index: 0, kind: input, shape index: {}]
  %s1 = inlined_call_operand.hbm [shape: f32[32,128], index: 1, kind: input, shape index: {}]
  %s2 = inlined_call_operand.vmem [shape: f32[1,128], index: 2, kind: input, shape index: {}]
  %s3 = inlined_call_operand.hbm [shape: f32[2,128], index: 3, kind: output, shape index: {}]
  %s4 = sld [smem:[#allocation0]]
  $region30: #{tpu_custom_call.1} parent=0
    _
  %s6 = ssub.s32 1, %s4
  %s7 = scalar_select 0, %s6, %s4
  $region1: #{tpu_custom_call.1} parent=0
    #allocation2 [shape = 'u8[65536]{0}', space=vmem, size = 0x10000, scoped, tag = 'input window, operand 0, single buffered']
    #allocation3 [shape = 's32[1]{0}', space=sflag, size = 0x4, scoped, tag = 'scoped memory for tpu_custom_call.1']
    #allocation4 [shape = 's32[1]{0}', space=sflag, size = 0x4, scoped, tag = 'scoped memory for tpu_custom_call.1']
    #allocation5 [shape = 'u8[16384]{0}', space=vmem, size = 0x4000, scoped, tag = 'input window, operand 1, single buffered']
    #allocation6 [shape = 's32[1]{0}', space=sflag, size = 0x4, scoped, tag = 'scoped memory for tpu_custom_call.1']
    #allocation7 [shape = 'u8[1024]{0}', space=vmem, size = 0x400, scoped, tag = 'output window, operand 0, single buffered']
    %8 = vsyncpa [#allocation3], 0
    %9 = vsyncpa [#allocation6], 0
    %10 = vsyncpa [#allocation4], 0
    // Predicated region
    $region2: #{tpu_custom_call.1} parent=1 // pred_check
      _
    $region3: #{tpu_custom_call.1} parent=1 // pred_check_branch
      %12 = sbr.rel (0) target = $region5
    $region4: #{tpu_custom_call.1} parent=1 // pred_region
      %s14 = ssub.s32 2048, 2048
      %15 = vsyncadd [#allocation3], %s14
      %s16 = sshll.u32 [#allocation2], 4
      %s17 = int_to_ptr.vmem [resolvable:$true] %s16
      %22 = dma.hbm_to_vmem [thread:$0]  %s0, 2048, %s17, [#allocation3], 256, 256, 16
    $region5: #{tpu_custom_call.1} parent=1 // pred_fallthru
      _
    // Predicated region
    $region6: #{tpu_custom_call.1} parent=1 // pred_check
      _
    $region7: #{tpu_custom_call.1} parent=1 // pred_check_branch
      %24 = sbr.rel (0) target = $region9
    $region8: #{tpu_custom_call.1} parent=1 // pred_region
      %s26 = ssub.s32 512, 512
      %27 = vsyncadd [#allocation6], %s26
      %s28 = sshll.u32 [#allocation5], 4
      %s29 = int_to_ptr.vmem [resolvable:$true] %s28
      %34 = dma.hbm_to_vmem [thread:$0]  %s1, 512, %s29, [#allocation6], 128, 128, 8
    $region9: #{tpu_custom_call.1} parent=1 // pred_fallthru
      _
    // Predicated region
    $region10: #{tpu_custom_call.1} parent=1 // pred_check
      _
    $region11: #{tpu_custom_call.1} parent=1 // pred_check_branch
      %36 = sbr.rel (0) target = $region13
    $region12: #{tpu_custom_call.1} parent=1 // pred_region
      _
    $region13: #{tpu_custom_call.1} parent=1 // pred_fallthru
      _
    // Predicated region
    $region14: #{tpu_custom_call.1} parent=1 // pred_check
      _
    $region15: #{tpu_custom_call.1} parent=1 // pred_check_branch
      %38 = sbr.rel (0) target = $region17
    $region16: #{tpu_custom_call.1} parent=1 // pred_region
      %39 = dma.done [#allocation3], 2048
    $region17: #{tpu_custom_call.1} parent=1 // pred_fallthru
      _
    // Predicated region
    $region18: #{tpu_custom_call.1} parent=1 // pred_check
      _
    $region19: #{tpu_custom_call.1} parent=1 // pred_check_branch
      %41 = sbr.rel (0) target = $region21
    $region20: #{tpu_custom_call.1} parent=1 // pred_region
      %42 = dma.done [#allocation6], 512
    $region21: #{tpu_custom_call.1} parent=1 // pred_fallthru
      _
    %v43 = vld [vmem:[#allocation2] sm:$0xff]
    %v44 = vld [vmem:[#allocation2 + $0x8] sm:$0xff]
    %v45 = vld [vmem:[#allocation2 + $0x10] sm:$0xff]
    %v46 = vld [vmem:[#allocation2 + $0x18] sm:$0xff]
    %v47 = vld [vmem:[#allocation2 + $0x20] sm:$0xff]
    %v48 = vld [vmem:[#allocation2 + $0x28] sm:$0xff]
    %v49 = vld [vmem:[#allocation2 + $0x30] sm:$0xff]
    %v50 = vld [vmem:[#allocation2 + $0x38] sm:$0xff]
    %v51 = vld [vmem:[#allocation2 + $0x40] sm:$0xff]
    %v52 = vld [vmem:[#allocation2 + $0x48] sm:$0xff]
    %v53 = vld [vmem:[#allocation2 + $0x50] sm:$0xff]
    %v54 = vld [vmem:[#allocation2 + $0x58] sm:$0xff]
    %v55 = vld [vmem:[#allocation2 + $0x60] sm:$0xff]
    %v56 = vld [vmem:[#allocation2 + $0x68] sm:$0xff]
    %v57 = vld [vmem:[#allocation2 + $0x70] sm:$0xff]
    %v58 = vld [vmem:[#allocation2 + $0x78] sm:$0xff]
    %v59 = vmax.f32 %v43, 1e-06
    %v60 = vmax.f32 %v44, 1e-06
    %v61 = vmax.f32 %v45, 1e-06
    %v62 = vmax.f32 %v46, 1e-06
    %v63 = vmax.f32 %v47, 1e-06
    %v64 = vmax.f32 %v48, 1e-06
    %v65 = vmax.f32 %v49, 1e-06
    %v66 = vmax.f32 %v50, 1e-06
    %v67 = vmax.f32 %v51, 1e-06
    %v68 = vmax.f32 %v52, 1e-06
    %v69 = vmax.f32 %v53, 1e-06
    %v70 = vmax.f32 %v54, 1e-06
    %v71 = vmax.f32 %v55, 1e-06
    %v72 = vmax.f32 %v56, 1e-06
    %v73 = vmax.f32 %v57, 1e-06
    %v74 = vmax.f32 %v58, 1e-06
    %v75 = vmul.f32 %v59, %v59
    %v76 = vmul.f32 %v60, %v60
    %v77 = vmul.f32 %v61, %v61
    %v78 = vmul.f32 %v62, %v62
    %v79 = vmul.f32 %v63, %v63
    %v80 = vmul.f32 %v64, %v64
    %v81 = vmul.f32 %v65, %v65
    %v82 = vmul.f32 %v66, %v66
    %v83 = vmul.f32 %v67, %v67
    %v84 = vmul.f32 %v68, %v68
    %v85 = vmul.f32 %v69, %v69
    %v86 = vmul.f32 %v70, %v70
    %v87 = vmul.f32 %v71, %v71
    %v88 = vmul.f32 %v72, %v72
    %v89 = vmul.f32 %v73, %v73
    %v90 = vmul.f32 %v74, %v74
    %v91 = vmul.f32 %v75, %v59
    %v92 = vmul.f32 %v76, %v60
    %v93 = vmul.f32 %v77, %v61
    %v94 = vmul.f32 %v78, %v62
    %v95 = vmul.f32 %v79, %v63
    %v96 = vmul.f32 %v80, %v64
    %v97 = vmul.f32 %v81, %v65
    %v98 = vmul.f32 %v82, %v66
    %v99 = vmul.f32 %v83, %v67
    %v100 = vmul.f32 %v84, %v68
    %v101 = vmul.f32 %v85, %v69
    %v102 = vmul.f32 %v86, %v70
    %v103 = vmul.f32 %v87, %v71
    %v104 = vmul.f32 %v88, %v72
    %v105 = vmul.f32 %v89, %v73
    %v106 = vmul.f32 %v90, %v74
    %v107 = vadd.f32 %v91, %v92
    %108 = vadd.xlane.f32.xlu0 %v107
    %v109 = vpop.xlane.xlu0 %108
    %v110 = vadd.f32 %v93, %v94
    %111 = vadd.xlane.f32.xlu0 %v110
    %v112 = vpop.xlane.xlu0 %111
    %v113 = vadd.f32 %v95, %v96
    %114 = vadd.xlane.f32.xlu0 %v113
    %v115 = vpop.xlane.xlu0 %114
    %v116 = vadd.f32 %v97, %v98
    %117 = vadd.xlane.f32.xlu0 %v116
    %v118 = vpop.xlane.xlu0 %117
    %v119 = vadd.f32 %v99, %v100
    %120 = vadd.xlane.f32.xlu0 %v119
    %v121 = vpop.xlane.xlu0 %120
    %v122 = vadd.f32 %v101, %v102
    %123 = vadd.xlane.f32.xlu0 %v122
    %v124 = vpop.xlane.xlu0 %123
    %v125 = vadd.f32 %v103, %v104
    %126 = vadd.xlane.f32.xlu0 %v125
    %v127 = vpop.xlane.xlu0 %126
    %v128 = vadd.f32 %v105, %v106
    %129 = vadd.xlane.f32.xlu0 %v128
    %v130 = vpop.xlane.xlu0 %129
    %v131 = vrcp.pop 256.0
    %v132 = vmul.f32 %v109, %v131
    %v133 = vmul.f32 %v112, %v131
    %v134 = vmul.f32 %v115, %v131
    %v135 = vmul.f32 %v118, %v131
    %v136 = vmul.f32 %v121, %v131
    %v137 = vmul.f32 %v124, %v131
    %v138 = vmul.f32 %v127, %v131
    %v139 = vmul.f32 %v130, %v131
    %v140 = vlog2.pop %v132
    %v141 = vmul.f32 %v140, 0.6931472
    %v142 = vlog2.pop %v133
    %v143 = vmul.f32 %v142, 0.6931472
    %v144 = vlog2.pop %v134
    %v145 = vmul.f32 %v144, 0.6931472
    %v146 = vlog2.pop %v135
    %v147 = vmul.f32 %v146, 0.6931472
    %v148 = vlog2.pop %v136
    %v149 = vmul.f32 %v148, 0.6931472
    %v150 = vlog2.pop %v137
    %v151 = vmul.f32 %v150, 0.6931472
    %v152 = vlog2.pop %v138
    %v153 = vmul.f32 %v152, 0.6931472
    %v154 = vlog2.pop %v139
    %v155 = vmul.f32 %v154, 0.6931472
    %v156 = vmul.f32 %v141, 0.33333334
    %v157 = vmul.f32 %v143, 0.33333334
    %v158 = vmul.f32 %v145, 0.33333334
    %v159 = vmul.f32 %v147, 0.33333334
    %v160 = vmul.f32 %v149, 0.33333334
    %v161 = vmul.f32 %v151, 0.33333334
    %v162 = vmul.f32 %v153, 0.33333334
    %v163 = vmul.f32 %v155, 0.33333334
    %v164 = vmul.f32 %v156, 1.442695
    %v165 = vpow.pop %v164
    %v166 = vmul.f32 %v157, 1.442695
    %v167 = vpow.pop %v166
    %v168 = vmul.f32 %v158, 1.442695
    %v169 = vpow.pop %v168
    %v170 = vmul.f32 %v159, 1.442695
    %v171 = vpow.pop %v170
    %v172 = vmul.f32 %v160, 1.442695
    %v173 = vpow.pop %v172
    %v174 = vmul.f32 %v161, 1.442695
    %v175 = vpow.pop %v174
    %v176 = vmul.f32 %v162, 1.442695
    %v177 = vpow.pop %v176
    %v178 = vmul.f32 %v163, 1.442695
    %v179 = vpow.pop %v178
    %v180 = vld [vmem:[#allocation5] sm:$0xff]
    %v181 = vld [vmem:[#allocation5 + $0x8] sm:$0xff]
    %v182 = vld [vmem:[#allocation5 + $0x10] sm:$0xff]
    %v183 = vld [vmem:[#allocation5 + $0x18] sm:$0xff]
    %v184 = vld [vmem:[%s2] sm:$0x1]
    %v186 = vlaneseq
    %v187 = vshrl.u32 %v186, 7
    %v188 = vsub.s32 0, %v187
    %v189 = vrot.slane %v184, %v188
    %v199 = vlaneseq
    %v200 = vand.u32 %v199, 127
    %v201 = vlaneseq
    %v202 = vshrl.u32 %v201, 7
    %v203 = vsub.s32 %v200, %v202
    %v204 = vrot.slane %v165, %v203
    %v205 = vadd.s32 %v200, 4294967288
    %v206 = vlaneseq
    %v207 = vshrl.u32 %v206, 7
    %v208 = vsub.s32 %v205, %v207
    %v209 = vrot.slane %v167, %v208
    %vm210 = vcmask 130112
    %v211 = vsel %vm210, %v209, %v204
    %v212 = vadd.s32 %v200, 4294967280
    %v213 = vlaneseq
    %v214 = vshrl.u32 %v213, 7
    %v215 = vsub.s32 %v212, %v214
    %v216 = vrot.slane %v169, %v215
    %vm217 = vcmask 195712
    %v218 = vsel %vm217, %v216, %v211
    %v219 = vadd.s32 %v200, 4294967272
    %v220 = vlaneseq
    %v221 = vshrl.u32 %v220, 7
    %v222 = vsub.s32 %v219, %v221
    %v223 = vrot.slane %v171, %v222
    %vm224 = vcmask 261312
    %v225 = vsel %vm224, %v223, %v218
    %v226 = vlaneseq
    %v227 = vshrl.u32 %v226, 7
    %v228 = vsub.s32 %v200, %v227
    %v229 = vrot.slane %v173, %v228
    %v230 = vlaneseq
    %v231 = vshrl.u32 %v230, 7
    %v232 = vsub.s32 %v205, %v231
    %v233 = vrot.slane %v175, %v232
    %v234 = vsel %vm210, %v233, %v229
    %v235 = vlaneseq
    %v236 = vshrl.u32 %v235, 7
    %v237 = vsub.s32 %v212, %v236
    %v238 = vrot.slane %v177, %v237
    %v239 = vsel %vm217, %v238, %v234
    %v240 = vlaneseq
    %v241 = vshrl.u32 %v240, 7
    %v242 = vsub.s32 %v219, %v241
    %v243 = vrot.slane %v179, %v242
    %v244 = vsel %vm224, %v243, %v239
    %vm245 = vcmask 1041409
    %v246 = vsel %vm245, %v244, %v225
    %vm247 = vcmask 261120
    %v248 = vsel %vm247, %v246, 0
    %250 = vmatprep.subr.mxu0 0.0
    %251 = vmatpush1.msra.mxu0 0.0
    %252 = vmatprep.subr.mxu0 0.0
    %253 = vmatpush1.msra.mxu0 0.0
    %254 = vmatprep.subr.mxu0 0.0
    %255 = vmatpush1.msra.mxu0 0.0
    %256 = vmatprep.subr.mxu0 0.0
    %257 = vmatpush1.msra.mxu0 0.0
    %258 = vmatprep.subr.mxu0 0.0
    %259 = vmatpush1.msra.mxu0 0.0
    %260 = vmatprep.subr.mxu0 0.0
    %261 = vmatpush1.msra.mxu0 0.0
    %262 = vmatprep.subr.mxu0 0.0
    %263 = vmatpush1.msra.mxu0 0.0
    %264 = vmatprep.subr.mxu0 0.0
    %265 = vmatpush1.msra.mxu0 0.0
    %266 = vmatprep.subr.mxu0 0.0
    %267 = vmatpush1.msra.mxu0 0.0
    %268 = vmatprep.subr.mxu0 0.0
    %269 = vmatpush1.msra.mxu0 0.0
    %270 = vmatprep.subr.mxu0 0.0
    %271 = vmatpush1.msra.mxu0 0.0
    %272 = vmatprep.subr.mxu0 0.0
    %273 = vmatpush1.msra.mxu0 0.0
    %274 = vmatprep.subr.mxu0 0.0
    %275 = vmatpush1.msra.mxu0 %v183
    %276 = vmatprep.subr.mxu0 0.0
    %277 = vmatpush1.msra.mxu0 %v182
    %278 = vmatprep.subr.mxu0 0.0
    %279 = vmatpush1.msra.mxu0 %v181
    %280 = vmatprep.subr.mxu0 0.0
    %281 = vmatpush1.msra.mxu0 %v180
    %282 = vmatprep.subr.mxu0 0.0
    %283 = vmatpush2.msra.mxu0 0.0
    %284 = vmatprep.subr.mxu0 0.0
    %285 = vmatpush2.msra.mxu0 0.0
    %286 = vmatprep.subr.mxu0 0.0
    %287 = vmatpush2.msra.mxu0 0.0
    %288 = vmatprep.subr.mxu0 0.0
    %289 = vmatpush2.msra.mxu0 0.0
    %290 = vmatprep.subr.mxu0 0.0
    %291 = vmatpush2.msra.mxu0 0.0
    %292 = vmatprep.subr.mxu0 0.0
    %293 = vmatpush2.msra.mxu0 0.0
    %294 = vmatprep.subr.mxu0 0.0
    %295 = vmatpush2.msra.mxu0 0.0
    %296 = vmatprep.subr.mxu0 0.0
    %297 = vmatpush2.msra.mxu0 0.0
    %298 = vmatprep.subr.mxu0 0.0
    %299 = vmatpush2.msra.mxu0 0.0
    %300 = vmatprep.subr.mxu0 0.0
    %301 = vmatpush2.msra.mxu0 0.0
    %302 = vmatprep.subr.mxu0 0.0
    %303 = vmatpush2.msra.mxu0 0.0
    %304 = vmatprep.subr.mxu0 0.0
    %305 = vmatpush2.msra.mxu0 0.0
    %306 = vmatprep.subr.mxu0 0.0
    %307 = vmatpush2.msra.mxu0 0.0
    %308 = vmatprep.subr.mxu0 0.0
    %309 = vmatpush2.msra.mxu0 0.0
    %310 = vmatprep.subr.mxu0 0.0
    %311 = vmatpush2.msra.mxu0 0.0
    %312 = vmatprep.subr.mxu0 0.0
    %313 = vmatpush2.msra.mxu0 0.0
    %314 = vmatprep.mubr.f32.mxu0 0.0
    %315 = vmatmul.mubr.f32.gmra.mxu0 %v248
    %v316 = vpop.f32.mrf.mxu0
    %v317 = vadd.f32 %v189, %v316
    %v318 = vpop.f32.mrf.mxu0
    %319 = vdwg.mxu0
    %320 = vst [vmem:[#allocation7] sm:$0x3] %v317
    // Predicated region
    $region22: #{tpu_custom_call.1} parent=1 // pred_check
      _
    $region23: #{tpu_custom_call.1} parent=1 // pred_check_branch
      %322 = sbr.rel (0) target = $region25
    $region24: #{tpu_custom_call.1} parent=1 // pred_region
      %s324 = ssub.s32 32, 32
      %325 = vsyncadd [#allocation4], %s324
      %s327 = sshll.u32 [#allocation7], 4
      %s328 = int_to_ptr.vmem [resolvable:$true] %s327
      %330 = dma.vmem_to_hbm [thread:$0]  %s328, 32, %s3, [#allocation4]
    $region25: #{tpu_custom_call.1} parent=1 // pred_fallthru
      _
    // Predicated region
    $region26: #{tpu_custom_call.1} parent=1 // pred_check
      _
    $region27: #{tpu_custom_call.1} parent=1 // pred_check_branch
      %332 = sbr.rel (0) target = $region29
    $region28: #{tpu_custom_call.1} parent=1 // pred_region
      %333 = dma.done [#allocation4], 32
    $region29: #{tpu_custom_call.1} parent=1 // pred_fallthru
      _
    %334 = vsyncpa [#allocation3], 1
    %335 = vsyncpa [#allocation6], 1
    %336 = vsyncpa [#allocation4], 1

</llo_original>
